<compile_context>
chip_gen: v6e
topology: v6e:2x2x1
jax: 0.10.0
libtpu: 0.0.40
codegen_flags: <defaults>
</compile_context>

<pallas_src>
import functools

import jax
import jax.numpy as jnp
from jax.experimental import pallas as pl
from jax.experimental.pallas import tpu as pltpu


# ----------------------------------------------------------------------------
# Pallas kernel: one grid step = Gb independent GNNCritic5 forwards
# ----------------------------------------------------------------------------
def _gnn_critic5_kernel(data_ref, ahat_ref, pslab_ref, out_ref, *,
                        N, Np, C, H, B, Gb, act_dim):
    GC = Gb * C
    GH = Gb * H
    rb = 2 * GC + GH                              # bias block start (8-aligned)

    # --- unpack data slab (region starts are 8-row aligned) ---
    state = data_ref[0:N, :]                      # (N, Gb*C)   lane-blocked states
    act1 = data_ref[Np:Np + N, :]                 # (N, Gb*C)   (action + 1), bcast over C

    # --- unpack parameter slab (all slices start on 8-row boundaries) ---
    wg = pslab_ref[0:GC, 0:GC]                    # (GC, GC) block-diag GCN weight
    w1 = pslab_ref[GC:2 * GC, :]                  # (GC, GH) block-diag lin1
    w2 = pslab_ref[2 * GC:2 * GC + GH, :]         # (GH, GH) block-diag lin2
    bg = pslab_ref[rb:rb + 1, 0:GC]               # (1, GC)
    b1 = pslab_ref[rb + 8:rb + 9, :]              # (1, GH)
    b2 = pslab_ref[rb + 16:rb + 17, :]            # (1, GH)
    w3 = pslab_ref[rb + 24:rb + 25, 0:H]          # (1, H)
    b3 = pslab_ref[rb + 32:rb + 33, 0:1]          # (1, 1)

    a_hat = ahat_ref[...]                         # (N, N) normalized adjacency

    # --- GCNConv: (A_hat @ X) @ Wg + bg, ReLU  (lane-dense MXU ops) ---
    ax = jnp.dot(a_hat, state, preferred_element_type=jnp.float32)       # (N, GC)
    h = jnp.maximum(jnp.dot(ax, wg, preferred_element_type=jnp.float32) + bg, 0.0)

    # --- residual + pointwise action scaling ---
    x = (h + state) * act1                                               # (N, GC)

    # --- lin1 -> relu -> lin2 -> relu (block-diag weights keep graphs in lanes) ---
    x = jnp.maximum(jnp.dot(x, w1, preferred_element_type=jnp.float32) + b1, 0.0)  # (N, GH)
    x = jnp.maximum(jnp.dot(x, w2, preferred_element_type=jnp.float32) + b2, 0.0)  # (N, GH)

    # --- readout: nodes are in slot-major order (row a*B + b), so the
    #     per-batch-element sum over act_dim nodes is a sum of contiguous
    #     (B, GH) row blocks — pure VPU adds, no seg matmul, no reshape ---
    s = x[0:B, :]
    for a in range(1, act_dim):
        s = s + x[a * B:(a + 1) * B, :]                                  # (B, GH)

    # --- lin3 per graph lane-block: VPU multiply + XLU lane reduce,
    #     results placed into lane g with an iota mask (no tiny matmul) ---
    lane = jax.lax.broadcasted_iota(jnp.int32, (B, Gb), 1)
    q = jnp.zeros((B, Gb), jnp.float32)
    for g in range(Gb):
        qg = jnp.sum(s[:, g * H:(g + 1) * H] * w3, axis=-1, keepdims=True)  # (B, 1)
        q = jnp.where(lane == g, qg, q)
    out_ref[...] = q + b3                                                # (B, Gb)


# ----------------------------------------------------------------------------
# JAX glue: GCN normalization (once, hoisted), param packing, pallas_call
# ----------------------------------------------------------------------------
def gcn_norm_dense(edge_index, num_nodes):
    """Dense D^{-1/2}(A + I)D^{-1/2} matching torch_geometric's GCNConv.

    Built with one-hot matmuls (no serialized scatter).  Computed ONCE per
    static graph and reused across forwards.  Note: duplicate edges in
    edge_index accumulate (same as scatter-add / torch_geometric).
    """
    src = edge_index[0]
    dst = edge_index[1]
    oh_src = jax.nn.one_hot(src, num_nodes, dtype=jnp.float32)   # (E, N)
    oh_dst = jax.nn.one_hot(dst, num_nodes, dtype=jnp.float32)   # (E, N)
    adj = oh_dst.T @ oh_src                                      # A[dst, src] += 1
    adj = adj + jnp.eye(num_nodes, dtype=jnp.float32)            # self loops
    deg = adj.sum(axis=1)
    dinv = jnp.where(deg > 0, 1.0 / jnp.sqrt(deg), 0.0)
    return adj * dinv[:, None] * dinv[None, :]


def pack_params(params, C, H, Gb):
    """Pack block-diagonal weights + 8-row-aligned bias rows into one slab."""
    assert H >= C, "packing assumes in_channels <= hidden_size"
    f32 = jnp.float32
    GC, GH = Gb * C, Gb * H
    eye = jnp.eye(Gb, dtype=f32)
    wg_bd = jnp.kron(eye, params["wg"].astype(f32))              # (GC, GC)
    w1_bd = jnp.kron(eye, params["w1"].astype(f32))              # (GC, GH)
    w2_bd = jnp.kron(eye, params["w2"].astype(f32))              # (GH, GH)

    rb = 2 * GC + GH
    slab = jnp.zeros((rb + 5 * 8, GH), f32)
    slab = slab.at[0:GC, 0:GC].set(wg_bd)
    slab = slab.at[GC:2 * GC, :].set(w1_bd)
    slab = slab.at[2 * GC:2 * GC + GH, :].set(w2_bd)
    slab = slab.at[rb, 0:GC].set(jnp.tile(params["bg"].astype(f32)[0], Gb))
    slab = slab.at[rb + 8, :].set(jnp.tile(params["b1"].astype(f32)[0], Gb))
    slab = slab.at[rb + 16, :].set(jnp.tile(params["b2"].astype(f32)[0], Gb))
    slab = slab.at[rb + 24, 0:H].set(params["w3"].astype(f32)[:, 0])
    slab = slab.at[rb + 32, 0].set(params["b3"].astype(f32)[0, 0])
    return slab                                                  # (2GC+GH+40, GH)


def gnn_critic5_forward(states, actions, a_hat, params, act_dim,
                        graphs_per_step=None):
    """Batched GNNCritic5 forward.

    states : (G, N, C)      N = B * act_dim nodes per graph
    actions: (G, B, act_dim)
    a_hat  : (N, N)         precomputed normalized adjacency (static graph)
    returns: (G, B)         Q-values
    """
    G, N, C = states.shape
    Ga, B, A = actions.shape
    assert Ga == G and A == act_dim and B * act_dim == N, \
        "states/actions shapes must satisfy N == B * act_dim"
    H = params["w1"].shape[1]

    # Gb graphs per grid step: fill 128 lanes (Gb*C ~ 128) -> one fat step for
    # the demo sizes; larger G gives a multi-step "parallel" grid (v7x 2-TC).
    if graphs_per_step is None:
        graphs_per_step = max(1, min(G, max(1, 128 // max(C, 1))))
    Gb = max(1, min(graphs_per_step, G))
    S = -(-G // Gb)                     # number of grid steps
    Gpad = S * Gb
    GC, GH = Gb * C, Gb * H
    Np = ((N + 7) // 8) * 8             # 8-row aligned region size

    # permute nodes to slot-major order (row a*B + b holds original node
    # b*act_dim + a) so the readout is a sum of contiguous row blocks.
    r = jnp.arange(N)
    perm = (r % B) * act_dim + (r // B)
    a_hat_p = a_hat.astype(jnp.float32)[perm][:, perm]           # (N, N)

    st = states.astype(jnp.float32)[:, perm, :]                  # (G, N, C)
    act_nodes = (actions.astype(jnp.float32).reshape(G, N) + 1.0)[:, perm]  # (G, N)

    if Gpad != G:
        st = jnp.concatenate(
            [st, jnp.zeros((Gpad - G, N, C), jnp.float32)], axis=0)
        act_nodes = jnp.concatenate(
            [act_nodes, jnp.zeros((Gpad - G, N), jnp.float32)], axis=0)

    # lane layout: data[s, n, g*C + c] = state / (action+1) of graph s*Gb+g
    st_l = st.reshape(S, Gb, N, C).transpose(0, 2, 1, 3).reshape(S, N, GC)
    ac_l = jnp.broadcast_to(
        act_nodes.reshape(S, Gb, N).transpose(0, 2, 1)[..., None],
        (S, N, Gb, C)).reshape(S, N, GC)

    data = jnp.zeros((S, 2 * Np, GC), jnp.float32)
    data = data.at[:, 0:N, :].set(st_l).at[:, Np:Np + N, :].set(ac_l)

    pslab = pack_params(params, C, H, Gb)                        # (2GC+GH+40, GH)

    kernel = functools.partial(_gnn_critic5_kernel, N=N, Np=Np, C=C, H=H,
                               B=B, Gb=Gb, act_dim=act_dim)

    flops_per_step = 2.0 * (N * N * GC + N * GC * GC + N * GC * GH
                            + N * GH * GH) + 6.0 * N * GH
    cost = pl.CostEstimate(
        flops=int(S * flops_per_step),
        transcendentals=0,
        bytes_accessed=int(4 * (data.size + a_hat_p.size + pslab.size
                                + S * B * Gb)),
    )

    out = pl.pallas_call(
        kernel,
        out_shape=jax.ShapeDtypeStruct((S, B, Gb), jnp.float32),
        grid=(S,),
        in_specs=[
            # leading None (== pl.Squeezed()) -> 2-D kernel refs
            pl.BlockSpec((None, 2 * Np, GC), lambda s: (s, 0, 0)),   # per-step data
            pl.BlockSpec((N, N), lambda s: (0, 0)),                  # shared A_hat
            pl.BlockSpec(pslab.shape, lambda s: (0, 0)),             # shared params
        ],
        out_specs=pl.BlockSpec((None, B, Gb), lambda s: (s, 0, 0)),
        compiler_params=pltpu.CompilerParams(
            dimension_semantics=("parallel",),
            vmem_limit_bytes=32 * 1024 * 1024),
        cost_estimate=cost,
    )(data, a_hat_p, pslab)

    # out[s, b, g] -> Q for graph s*Gb + g, batch element b
    q = out.transpose(0, 2, 1).reshape(Gpad, B)[:G]
    return q                                                     # (G, B)


# pure-JAX reference (mirrors the PyTorch forward) for correctness check
def gnn_critic5_reference(state, action, a_hat, params, act_dim):
    N, C = state.shape
    B = N // act_dim
    h = jax.nn.relu(a_hat @ state @ params["wg"] + params["bg"])
    x = h + state
    x = x.reshape(B, act_dim, C)
    x = x * (action + 1.0)[..., None]
    x = jax.nn.relu(x @ params["w1"] + params["b1"])
    x = jax.nn.relu(x @ params["w2"] + params["b2"])
    x = x.sum(axis=1)
    return (x @ params["w3"] + params["b3"])[..., 0]


def init_params(key, in_channels, hidden_size):
    ks = jax.random.split(key, 4)
    scale = 0.1
    return {
        "wg": scale * jax.random.normal(ks[0], (in_channels, in_channels), jnp.float32),
        "bg": jnp.zeros((1, in_channels), jnp.float32),
        "w1": scale * jax.random.normal(ks[1], (in_channels, hidden_size), jnp.float32),
        "b1": jnp.full((1, hidden_size), 0.01, jnp.float32),
        "w2": scale * jax.random.normal(ks[2], (hidden_size, hidden_size), jnp.float32),
        "b2": jnp.full((1, hidden_size), 0.01, jnp.float32),
        "w3": scale * jax.random.normal(ks[3], (hidden_size, 1), jnp.float32),
        "b3": jnp.zeros((1, 1), jnp.float32),
    }


if __name__ == "__main__":
    # small shapes consistent with the module's forward:
    #   per-forward state: (N, in_channels) with N = batch * act_dim
    act_dim = 6
    in_channels = 16
    hidden_size = 32
    batch = 2          # B: batch elements inside one forward (readout groups)
    G = 8              # number of independent forwards fused into one call
    N = batch * act_dim

    key = jax.random.PRNGKey(0)
    k_state, k_act, k_par = jax.random.split(key, 3)

    states = jax.random.normal(k_state, (G, N, in_channels), jnp.float32)
    actions = jax.random.uniform(k_act, (G, batch, act_dim), jnp.float32)

    # deterministic ring graph (both directions), edge_index shape (2, 2N)
    idx = jnp.arange(N)
    src = jnp.concatenate([idx, (idx + 1) % N])
    dst = jnp.concatenate([(idx + 1) % N, idx])
    edge_index = jnp.stack([src, dst]).astype(jnp.int32)

    params = init_params(k_par, in_channels, hidden_size)

    # hoisted: normalized adjacency built once for the static graph
    a_hat = gcn_norm_dense(edge_index, N)

    out = gnn_critic5_forward(states, actions, a_hat, params, act_dim)
    out = jax.block_until_ready(out)

    ref = jax.vmap(
        lambda s, a: gnn_critic5_reference(s, a, a_hat, params, act_dim)
    )(states, actions)

    assert out.shape == (G, batch), out.shape
    assert jnp.allclose(out, ref, atol=1e-4, rtol=1e-4), (out, ref)

    print("KERNEL_OK")
</pallas_src>

<mosaic_0001>
module attributes {stable_mosaic.version = 11 : i64} {
  func.func @_gnn_critic5_kernel(%arg0: i32, %arg1: memref<1x32x128xf32, #tpu.memory_space<vmem>>, %arg2: memref<12x12xf32, #tpu.memory_space<vmem>>, %arg3: memref<552x256xf32, #tpu.memory_space<vmem>>, %arg4: memref<1x2x8xf32, #tpu.memory_space<vmem>>) attributes {dimension_semantics = [#tpu.dimension_semantics<parallel>], iteration_bounds = array<i64: 1>, scalar_prefetch = 0 : i64, scratch_operands = 0 : i64, tpu.core_type = #tpu.core_type<tc>, window_params = [{transform_indices = @transform_0, window_bounds = array<i64: 1, 32, 128>}, {pipeline_mode = #tpu.pipeline_mode<synchronous>, transform_indices = @transform_1, window_bounds = array<i64: 12, 12>}, {pipeline_mode = #tpu.pipeline_mode<synchronous>, transform_indices = @transform_2, window_bounds = array<i64: 552, 256>}, {transform_indices = @transform_3, window_bounds = array<i64: 1, 2, 8>}]} {
    %c0 = arith.constant 0 : index
    %c0_0 = arith.constant 0 : index
    %c0_1 = arith.constant 0 : index
    %0 = vector.load %arg1[%c0, %c0_0, %c0_1] : memref<1x32x128xf32, #tpu.memory_space<vmem>>, vector<1x12x128xf32>
    %1 = vector.shape_cast %0 : vector<1x12x128xf32> to vector<12x128xf32>
    %c0_2 = arith.constant 0 : index
    %c16 = arith.constant 16 : index
    %c0_3 = arith.constant 0 : index
    %2 = vector.load %arg1[%c0_2, %c16, %c0_3] : memref<1x32x128xf32, #tpu.memory_space<vmem>>, vector<1x12x128xf32>
    %3 = vector.shape_cast %2 : vector<1x12x128xf32> to vector<12x128xf32>
    %c0_4 = arith.constant 0 : index
    %c0_5 = arith.constant 0 : index
    %4 = vector.load %arg3[%c0_4, %c0_5] : memref<552x256xf32, #tpu.memory_space<vmem>>, vector<128x128xf32>
    %c128 = arith.constant 128 : index
    %c0_6 = arith.constant 0 : index
    %5 = vector.load %arg3[%c128, %c0_6] : memref<552x256xf32, #tpu.memory_space<vmem>>, vector<128x256xf32>
    %c256 = arith.constant 256 : index
    %c0_7 = arith.constant 0 : index
    %6 = vector.load %arg3[%c256, %c0_7] : memref<552x256xf32, #tpu.memory_space<vmem>>, vector<256x256xf32>
    %c512 = arith.constant 512 : index
    %c0_8 = arith.constant 0 : index
    %7 = vector.load %arg3[%c512, %c0_8] : memref<552x256xf32, #tpu.memory_space<vmem>>, vector<1x128xf32>
    %c520 = arith.constant 520 : index
    %c0_9 = arith.constant 0 : index
    %8 = vector.load %arg3[%c520, %c0_9] : memref<552x256xf32, #tpu.memory_space<vmem>>, vector<1x256xf32>
    %c528 = arith.constant 528 : index
    %c0_10 = arith.constant 0 : index
    %9 = vector.load %arg3[%c528, %c0_10] : memref<552x256xf32, #tpu.memory_space<vmem>>, vector<1x256xf32>
    %c536 = arith.constant 536 : index
    %c0_11 = arith.constant 0 : index
    %10 = vector.load %arg3[%c536, %c0_11] : memref<552x256xf32, #tpu.memory_space<vmem>>, vector<1x32xf32>
    %c544 = arith.constant 544 : index
    %c0_12 = arith.constant 0 : index
    %11 = vector.load %arg3[%c544, %c0_12] : memref<552x256xf32, #tpu.memory_space<vmem>>, vector<1x1xf32>
    %c0_13 = arith.constant 0 : index
    %c0_14 = arith.constant 0 : index
    %12 = vector.load %arg2[%c0_13, %c0_14] : memref<12x12xf32, #tpu.memory_space<vmem>>, vector<12x12xf32>
    %cst = arith.constant dense<0.000000e+00> : vector<12x128xf32>
    %13 = tpu.matmul %12, %1, %cst {dimension_numbers = #tpu.dot_dimension_numbers<[1], [0], [0], [1], [0, 0, 1, 1], [], []>} : vector<12x12xf32>, vector<12x128xf32>, vector<12x128xf32> -> vector<12x128xf32>
    %cst_15 = arith.constant dense<0.000000e+00> : vector<12x128xf32>
    %14 = tpu.matmul %13, %4, %cst_15 {dimension_numbers = #tpu.dot_dimension_numbers<[1], [0], [0], [1], [0, 0, 1, 1], [], []>} : vector<12x128xf32>, vector<128x128xf32>, vector<12x128xf32> -> vector<12x128xf32>
    %15 = vector.broadcast %7 : vector<1x128xf32> to vector<12x128xf32>
    %16 = arith.addf %14, %15 : vector<12x128xf32>
    %cst_16 = arith.constant 0.000000e+00 : f32
    %17 = vector.broadcast %cst_16 : f32 to vector<12x128xf32>
    %18 = arith.maximumf %16, %17 : vector<12x128xf32>
    %19 = arith.addf %18, %1 : vector<12x128xf32>
    %20 = arith.mulf %19, %3 : vector<12x128xf32>
    %cst_17 = arith.constant dense<0.000000e+00> : vector<12x256xf32>
    %21 = tpu.matmul %20, %5, %cst_17 {dimension_numbers = #tpu.dot_dimension_numbers<[1], [0], [0], [1], [0, 0, 1, 1], [], []>} : vector<12x128xf32>, vector<128x256xf32>, vector<12x256xf32> -> vector<12x256xf32>
    %22 = vector.broadcast %8 : vector<1x256xf32> to vector<12x256xf32>
    %23 = arith.addf %21, %22 : vector<12x256xf32>
    %cst_18 = arith.constant 0.000000e+00 : f32
    %24 = vector.broadcast %cst_18 : f32 to vector<12x256xf32>
    %25 = arith.maximumf %23, %24 : vector<12x256xf32>
    %cst_19 = arith.constant dense<0.000000e+00> : vector<12x256xf32>
    %26 = tpu.matmul %25, %6, %cst_19 {dimension_numbers = #tpu.dot_dimension_numbers<[1], [0], [0], [1], [0, 0, 1, 1], [], []>} : vector<12x256xf32>, vector<256x256xf32>, vector<12x256xf32> -> vector<12x256xf32>
    %27 = vector.broadcast %9 : vector<1x256xf32> to vector<12x256xf32>
    %28 = arith.addf %26, %27 : vector<12x256xf32>
    %cst_20 = arith.constant 0.000000e+00 : f32
    %29 = vector.broadcast %cst_20 : f32 to vector<12x256xf32>
    %30 = arith.maximumf %28, %29 : vector<12x256xf32>
    %31 = vector.extract_strided_slice %30 {offsets = [0, 0], sizes = [2, 256], strides = [1, 1]} : vector<12x256xf32> to vector<2x256xf32>
    %32 = vector.extract_strided_slice %30 {offsets = [2, 0], sizes = [2, 256], strides = [1, 1]} : vector<12x256xf32> to vector<2x256xf32>
    %33 = arith.addf %31, %32 : vector<2x256xf32>
    %34 = vector.extract_strided_slice %30 {offsets = [4, 0], sizes = [2, 256], strides = [1, 1]} : vector<12x256xf32> to vector<2x256xf32>
    %35 = arith.addf %33, %34 : vector<2x256xf32>
    %36 = vector.extract_strided_slice %30 {offsets = [6, 0], sizes = [2, 256], strides = [1, 1]} : vector<12x256xf32> to vector<2x256xf32>
    %37 = arith.addf %35, %36 : vector<2x256xf32>
    %38 = vector.extract_strided_slice %30 {offsets = [8, 0], sizes = [2, 256], strides = [1, 1]} : vector<12x256xf32> to vector<2x256xf32>
    %39 = arith.addf %37, %38 : vector<2x256xf32>
    %40 = vector.extract_strided_slice %30 {offsets = [10, 0], sizes = [2, 256], strides = [1, 1]} : vector<12x256xf32> to vector<2x256xf32>
    %41 = arith.addf %39, %40 : vector<2x256xf32>
    %42 = tpu.iota {dimensions = array<i32: 1>} : vector<2x8xi32>
    %cst_21 = arith.constant 0.000000e+00 : f32
    %43 = vector.broadcast %cst_21 : f32 to vector<2x8xf32>
    %44 = vector.extract_strided_slice %41 {offsets = [0, 0], sizes = [2, 32], strides = [1, 1]} : vector<2x256xf32> to vector<2x32xf32>
    %45 = vector.broadcast %10 : vector<1x32xf32> to vector<2x32xf32>
    %46 = arith.mulf %44, %45 : vector<2x32xf32>
    %cst_22 = arith.constant dense<0.000000e+00> : vector<2xf32>
    %47 = vector.multi_reduction <add>, %46, %cst_22 [1] : vector<2x32xf32> to vector<2xf32>
    %48 = vector.shape_cast %47 : vector<2xf32> to vector<2x1xf32>
    %c0_i32 = arith.constant 0 : i32
    %49 = vector.broadcast %c0_i32 : i32 to vector<2x8xi32>
    %50 = arith.cmpi eq, %42, %49 : vector<2x8xi32>
    %51 = vector.shape_cast %48 : vector<2x1xf32> to vector<2x1xf32>
    %52 = vector.broadcast %51 : vector<2x1xf32> to vector<2x8xf32>
    %53 = arith.select %50, %52, %43 : vector<2x8xi1>, vector<2x8xf32>
    %54 = vector.extract_strided_slice %41 {offsets = [0, 32], sizes = [2, 32], strides = [1, 1]} : vector<2x256xf32> to vector<2x32xf32>
    %55 = vector.broadcast %10 : vector<1x32xf32> to vector<2x32xf32>
    %56 = arith.mulf %54, %55 : vector<2x32xf32>
    %cst_23 = arith.constant dense<0.000000e+00> : vector<2xf32>
    %57 = vector.multi_reduction <add>, %56, %cst_23 [1] : vector<2x32xf32> to vector<2xf32>
    %58 = vector.shape_cast %57 : vector<2xf32> to vector<2x1xf32>
    %c1_i32 = arith.constant 1 : i32
    %59 = vector.broadcast %c1_i32 : i32 to vector<2x8xi32>
    %60 = arith.cmpi eq, %42, %59 : vector<2x8xi32>
    %61 = vector.shape_cast %58 : vector<2x1xf32> to vector<2x1xf32>
    %62 = vector.broadcast %61 : vector<2x1xf32> to vector<2x8xf32>
    %63 = arith.select %60, %62, %53 : vector<2x8xi1>, vector<2x8xf32>
    %64 = vector.extract_strided_slice %41 {offsets = [0, 64], sizes = [2, 32], strides = [1, 1]} : vector<2x256xf32> to vector<2x32xf32>
    %65 = vector.broadcast %10 : vector<1x32xf32> to vector<2x32xf32>
    %66 = arith.mulf %64, %65 : vector<2x32xf32>
    %cst_24 = arith.constant dense<0.000000e+00> : vector<2xf32>
    %67 = vector.multi_reduction <add>, %66, %cst_24 [1] : vector<2x32xf32> to vector<2xf32>
    %68 = vector.shape_cast %67 : vector<2xf32> to vector<2x1xf32>
    %c2_i32 = arith.constant 2 : i32
    %69 = vector.broadcast %c2_i32 : i32 to vector<2x8xi32>
    %70 = arith.cmpi eq, %42, %69 : vector<2x8xi32>
    %71 = vector.shape_cast %68 : vector<2x1xf32> to vector<2x1xf32>
    %72 = vector.broadcast %71 : vector<2x1xf32> to vector<2x8xf32>
    %73 = arith.select %70, %72, %63 : vector<2x8xi1>, vector<2x8xf32>
    %74 = vector.extract_strided_slice %41 {offsets = [0, 96], sizes = [2, 32], strides = [1, 1]} : vector<2x256xf32> to vector<2x32xf32>
    %75 = vector.broadcast %10 : vector<1x32xf32> to vector<2x32xf32>
    %76 = arith.mulf %74, %75 : vector<2x32xf32>
    %cst_25 = arith.constant dense<0.000000e+00> : vector<2xf32>
    %77 = vector.multi_reduction <add>, %76, %cst_25 [1] : vector<2x32xf32> to vector<2xf32>
    %78 = vector.shape_cast %77 : vector<2xf32> to vector<2x1xf32>
    %c3_i32 = arith.constant 3 : i32
    %79 = vector.broadcast %c3_i32 : i32 to vector<2x8xi32>
    %80 = arith.cmpi eq, %42, %79 : vector<2x8xi32>
    %81 = vector.shape_cast %78 : vector<2x1xf32> to vector<2x1xf32>
    %82 = vector.broadcast %81 : vector<2x1xf32> to vector<2x8xf32>
    %83 = arith.select %80, %82, %73 : vector<2x8xi1>, vector<2x8xf32>
    %84 = vector.extract_strided_slice %41 {offsets = [0, 128], sizes = [2, 32], strides = [1, 1]} : vector<2x256xf32> to vector<2x32xf32>
    %85 = vector.broadcast %10 : vector<1x32xf32> to vector<2x32xf32>
    %86 = arith.mulf %84, %85 : vector<2x32xf32>
    %cst_26 = arith.constant dense<0.000000e+00> : vector<2xf32>
    %87 = vector.multi_reduction <add>, %86, %cst_26 [1] : vector<2x32xf32> to vector<2xf32>
    %88 = vector.shape_cast %87 : vector<2xf32> to vector<2x1xf32>
    %c4_i32 = arith.constant 4 : i32
    %89 = vector.broadcast %c4_i32 : i32 to vector<2x8xi32>
    %90 = arith.cmpi eq, %42, %89 : vector<2x8xi32>
    %91 = vector.shape_cast %88 : vector<2x1xf32> to vector<2x1xf32>
    %92 = vector.broadcast %91 : vector<2x1xf32> to vector<2x8xf32>
    %93 = arith.select %90, %92, %83 : vector<2x8xi1>, vector<2x8xf32>
    %94 = vector.extract_strided_slice %41 {offsets = [0, 160], sizes = [2, 32], strides = [1, 1]} : vector<2x256xf32> to vector<2x32xf32>
    %95 = vector.broadcast %10 : vector<1x32xf32> to vector<2x32xf32>
    %96 = arith.mulf %94, %95 : vector<2x32xf32>
    %cst_27 = arith.constant dense<0.000000e+00> : vector<2xf32>
    %97 = vector.multi_reduction <add>, %96, %cst_27 [1] : vector<2x32xf32> to vector<2xf32>
    %98 = vector.shape_cast %97 : vector<2xf32> to vector<2x1xf32>
    %c5_i32 = arith.constant 5 : i32
    %99 = vector.broadcast %c5_i32 : i32 to vector<2x8xi32>
    %100 = arith.cmpi eq, %42, %99 : vector<2x8xi32>
    %101 = vector.shape_cast %98 : vector<2x1xf32> to vector<2x1xf32>
    %102 = vector.broadcast %101 : vector<2x1xf32> to vector<2x8xf32>
    %103 = arith.select %100, %102, %93 : vector<2x8xi1>, vector<2x8xf32>
    %104 = vector.extract_strided_slice %41 {offsets = [0, 192], sizes = [2, 32], strides = [1, 1]} : vector<2x256xf32> to vector<2x32xf32>
    %105 = vector.broadcast %10 : vector<1x32xf32> to vector<2x32xf32>
    %106 = arith.mulf %104, %105 : vector<2x32xf32>
    %cst_28 = arith.constant dense<0.000000e+00> : vector<2xf32>
    %107 = vector.multi_reduction <add>, %106, %cst_28 [1] : vector<2x32xf32> to vector<2xf32>
    %108 = vector.shape_cast %107 : vector<2xf32> to vector<2x1xf32>
    %c6_i32 = arith.constant 6 : i32
    %109 = vector.broadcast %c6_i32 : i32 to vector<2x8xi32>
    %110 = arith.cmpi eq, %42, %109 : vector<2x8xi32>
    %111 = vector.shape_cast %108 : vector<2x1xf32> to vector<2x1xf32>
    %112 = vector.broadcast %111 : vector<2x1xf32> to vector<2x8xf32>
    %113 = arith.select %110, %112, %103 : vector<2x8xi1>, vector<2x8xf32>
    %114 = vector.extract_strided_slice %41 {offsets = [0, 224], sizes = [2, 32], strides = [1, 1]} : vector<2x256xf32> to vector<2x32xf32>
    %115 = vector.broadcast %10 : vector<1x32xf32> to vector<2x32xf32>
    %116 = arith.mulf %114, %115 : vector<2x32xf32>
    %cst_29 = arith.constant dense<0.000000e+00> : vector<2xf32>
    %117 = vector.multi_reduction <add>, %116, %cst_29 [1] : vector<2x32xf32> to vector<2xf32>
    %118 = vector.shape_cast %117 : vector<2xf32> to vector<2x1xf32>
    %c7_i32 = arith.constant 7 : i32
    %119 = vector.broadcast %c7_i32 : i32 to vector<2x8xi32>
    %120 = arith.cmpi eq, %42, %119 : vector<2x8xi32>
    %121 = vector.shape_cast %118 : vector<2x1xf32> to vector<2x1xf32>
    %122 = vector.broadcast %121 : vector<2x1xf32> to vector<2x8xf32>
    %123 = arith.select %120, %122, %113 : vector<2x8xi1>, vector<2x8xf32>
    %124 = vector.broadcast %11 : vector<1x1xf32> to vector<2x8xf32>
    %125 = arith.addf %123, %124 : vector<2x8xf32>
    %c0_30 = arith.constant 0 : index
    %c0_31 = arith.constant 0 : index
    %c0_32 = arith.constant 0 : index
    %126 = vector.load %arg4[%c0_30, %c0_31, %c0_32] : memref<1x2x8xf32, #tpu.memory_space<vmem>>, vector<1x2x8xf32>
    %127 = vector.shape_cast %126 : vector<1x2x8xf32> to vector<2x8xf32>
    %128 = vector.shape_cast %125 : vector<2x8xf32> to vector<1x2x8xf32>
    tpu.vector_store %arg4[%c0_30, %c0_31, %c0_32], %128 {strides = array<i32>} : memref<1x2x8xf32, #tpu.memory_space<vmem>>, vector<1x2x8xf32>,
    return
  }
  func.func @transform_0(%arg0: i32) -> (i32, i32, i32) {
    %c0_i32 = arith.constant 0 : i32
    %c0_i32_0 = arith.constant 0 : i32
    %c0_i32_1 = arith.constant 0 : i32
    return %arg0, %c0_i32, %c0_i32_0 : i32, i32, i32
  }
  func.func @transform_1(%arg0: i32) -> (i32, i32) {
    %c0_i32 = arith.constant 0 : i32
    %c0_i32_0 = arith.constant 0 : i32
    %c0_i32_1 = arith.constant 0 : i32
    return %c0_i32, %c0_i32_0 : i32, i32
  }
  func.func @transform_2(%arg0: i32) -> (i32, i32) {
    %c0_i32 = arith.constant 0 : i32
    %c0_i32_0 = arith.constant 0 : i32
    %c0_i32_1 = arith.constant 0 : i32
    return %c0_i32, %c0_i32_0 : i32, i32
  }
  func.func @transform_3(%arg0: i32) -> (i32, i32, i32) {
    %c0_i32 = arith.constant 0 : i32
    %c0_i32_0 = arith.constant 0 : i32
    %c0_i32_1 = arith.constant 0 : i32
    return %arg0, %c0_i32, %c0_i32_0 : i32, i32, i32
  }
}

</mosaic_0001>

<llo_original>
// kernel: tpu_custom_call.1
$region0: #{tpu_custom_call.1}
  #allocation0 [shape = 'u32[]', space=smem, size = 0x4, offset = 0x4, fixed_abs, tag = 'smem constant byte address 0x4 - core index']
  #allocation1 [shape = 'u32[144,128]{1,0:T(1,128)}', space=vmem, size = 0x12000, scoped, tag = 'internal scratch']
  %s0 = inlined_call_operand.hbm [shape: f32[1,32,128], index: 0, kind: input, shape index: {}]
  %s1 = inlined_call_operand.hbm [shape: f32[12,12], index: 1, kind: input, shape index: {}]
  %s2 = inlined_call_operand.hbm [shape: f32[552,256], index: 2, kind: input, shape index: {}]
  %s3 = inlined_call_operand.hbm [shape: f32[1,2,8], index: 3, kind: output, shape index: {}]
  %s4 = sld [smem:[#allocation0]]
  $region34: #{tpu_custom_call.1} parent=0
    _
  %s6 = ssub.s32 1, %s4
  %s7 = scalar_select 0, %s6, %s4
  $region1: #{tpu_custom_call.1} parent=0
    #allocation2 [shape = 'u8[16384]{0}', space=vmem, size = 0x4000, scoped, tag = 'input window, operand 0, single buffered']
    #allocation3 [shape = 's32[1]{0}', space=sflag, size = 0x4, scoped, tag = 'scoped memory for tpu_custom_call.1']
    #allocation4 [shape = 's32[1]{0}', space=sflag, size = 0x4, scoped, tag = 'scoped memory for tpu_custom_call.1']
    #allocation5 [shape = 'u8[8192]{0}', space=vmem, size = 0x2000, scoped, tag = 'input window, operand 1, single buffered']
    #allocation6 [shape = 's32[1]{0}', space=sflag, size = 0x4, scoped, tag = 'scoped memory for tpu_custom_call.1']
    #allocation7 [shape = 'u8[565248]{0}', space=vmem, size = 0x8a000, scoped, tag = 'input window, operand 2, single buffered']
    #allocation8 [shape = 'u8[1024]{0}', space=vmem, size = 0x400, scoped, tag = 'output window, operand 0, single buffered']
    %8 = vsyncpa [#allocation3], 0
    %9 = vsyncpa [#allocation6], 0
    %10 = vsyncpa [#allocation4], 0
    // Predicated region
    $region2: #{tpu_custom_call.1} parent=1 // pred_check
      _
    $region3: #{tpu_custom_call.1} parent=1 // pred_check_branch
      %12 = sbr.rel (0) target = $region5
    $region4: #{tpu_custom_call.1} parent=1 // pred_region
      %s14 = ssub.s32 512, 512
      %15 = vsyncadd [#allocation3], %s14
      %s16 = sshll.u32 [#allocation2], 4
      %s17 = int_to_ptr.vmem [resolvable:$true] %s16
      %22 = dma.hbm_to_vmem [thread:$0]  %s0, 512, %s17, [#allocation3], 128, 128, 8
    $region5: #{tpu_custom_call.1} parent=1 // pred_fallthru
      _
    // Predicated region
    $region6: #{tpu_custom_call.1} parent=1 // pred_check
      _
    $region7: #{tpu_custom_call.1} parent=1 // pred_check_branch
      %24 = sbr.rel (0) target = $region9
    $region8: #{tpu_custom_call.1} parent=1 // pred_region
      %s26 = ssub.s32 256, 256
      %27 = vsyncadd [#allocation6], %s26
      %s28 = sshll.u32 [#allocation5], 4
      %s29 = int_to_ptr.vmem [resolvable:$true] %s28
      %34 = dma.hbm_to_vmem [thread:$0]  %s1, 256, %s29, [#allocation6], 128, 128, 8
    $region9: #{tpu_custom_call.1} parent=1 // pred_fallthru
      _
    // Predicated region
    $region10: #{tpu_custom_call.1} parent=1 // pred_check
      _
    $region11: #{tpu_custom_call.1} parent=1 // pred_check_branch
      %36 = sbr.rel (0) target = $region13
    $region12: #{tpu_custom_call.1} parent=1 // pred_region
      %s38 = ssub.s32 17664, 17664
      %39 = vsyncadd [#allocation6], %s38
      %s40 = sshll.u32 [#allocation7], 4
      %s41 = int_to_ptr.vmem [resolvable:$true] %s40
      %46 = dma.hbm_to_vmem [thread:$0]  %s2, 17664, %s41, [#allocation6], 256, 256, 16
    $region13: #{tpu_custom_call.1} parent=1 // pred_fallthru
      _
    // Predicated region
    $region14: #{tpu_custom_call.1} parent=1 // pred_check
      _
    $region15: #{tpu_custom_call.1} parent=1 // pred_check_branch
      %48 = sbr.rel (0) target = $region17
    $region16: #{tpu_custom_call.1} parent=1 // pred_region
      %49 = dma.done [#allocation3], 512
    $region17: #{tpu_custom_call.1} parent=1 // pred_fallthru
      _
    // Predicated region
    $region18: #{tpu_custom_call.1} parent=1 // pred_check
      _
    $region19: #{tpu_custom_call.1} parent=1 // pred_check_branch
      %51 = sbr.rel (0) target = $region21
    $region20: #{tpu_custom_call.1} parent=1 // pred_region
      %52 = dma.done [#allocation6], 256
    $region21: #{tpu_custom_call.1} parent=1 // pred_fallthru
      _
    // Predicated region
    $region22: #{tpu_custom_call.1} parent=1 // pred_check
      _
    $region23: #{tpu_custom_call.1} parent=1 // pred_check_branch
      %54 = sbr.rel (0) target = $region25
    $region24: #{tpu_custom_call.1} parent=1 // pred_region
      %55 = dma.done [#allocation6], 17664
    $region25: #{tpu_custom_call.1} parent=1 // pred_fallthru
      _
    %v56 = vld [vmem:[#allocation2] sm:$0xff]
    %v57 = vld [vmem:[#allocation2 + $0x8] sm:$0xf]
    %v58 = vld [vmem:[#allocation2 + $0x10] sm:$0xff]
    %v59 = vld [vmem:[#allocation2 + $0x18] sm:$0xf]
    %v60 = vld [vmem:[#allocation7] sm:$0xff]
    %v61 = vld [vmem:[#allocation7 + $0x10] sm:$0xff]
    %v62 = vld [vmem:[#allocation7 + $0x20] sm:$0xff]
    %v63 = vld [vmem:[#allocation7 + $0x30] sm:$0xff]
    %v64 = vld [vmem:[#allocation7 + $0x40] sm:$0xff]
    %v65 = vld [vmem:[#allocation7 + $0x50] sm:$0xff]
    %v66 = vld [vmem:[#allocation7 + $0x60] sm:$0xff]
    %v67 = vld [vmem:[#allocation7 + $0x70] sm:$0xff]
    %v68 = vld [vmem:[#allocation7 + $0x80] sm:$0xff]
    %v69 = vld [vmem:[#allocation7 + $0x90] sm:$0xff]
    %v70 = vld [vmem:[#allocation7 + $0xa0] sm:$0xff]
    %v71 = vld [vmem:[#allocation7 + $0xb0] sm:$0xff]
    %v72 = vld [vmem:[#allocation7 + $0xc0] sm:$0xff]
    %v73 = vld [vmem:[#allocation7 + $0xd0] sm:$0xff]
    %v74 = vld [vmem:[#allocation7 + $0xe0] sm:$0xff]
    %v75 = vld [vmem:[#allocation7 + $0xf0] sm:$0xff]
    %v76 = vld [vmem:[#allocation7 + $0x100] sm:$0xff]
    %v77 = vld [vmem:[#allocation7 + $0x108] sm:$0xff]
    %v78 = vld [vmem:[#allocation7 + $0x110] sm:$0xff]
    %v79 = vld [vmem:[#allocation7 + $0x118] sm:$0xff]
    %v80 = vld [vmem:[#allocation7 + $0x120] sm:$0xff]
    %v81 = vld [vmem:[#allocation7 + $0x128] sm:$0xff]
    %v82 = vld [vmem:[#allocation7 + $0x130] sm:$0xff]
    %v83 = vld [vmem:[#allocation7 + $0x138] sm:$0xff]
    %v84 = vld [vmem:[#allocation7 + $0x140] sm:$0xff]
    %v85 = vld [vmem:[#allocation7 + $0x148] sm:$0xff]
    %v86 = vld [vmem:[#allocation7 + $0x150] sm:$0xff]
    %v87 = vld [vmem:[#allocation7 + $0x158] sm:$0xff]
    %v88 = vld [vmem:[#allocation7 + $0x160] sm:$0xff]
    %v89 = vld [vmem:[#allocation7 + $0x168] sm:$0xff]
    %v90 = vld [vmem:[#allocation7 + $0x170] sm:$0xff]
    %v91 = vld [vmem:[#allocation7 + $0x178] sm:$0xff]
    %v92 = vld [vmem:[#allocation7 + $0x180] sm:$0xff]
    %v93 = vld [vmem:[#allocation7 + $0x188] sm:$0xff]
    %v94 = vld [vmem:[#allocation7 + $0x190] sm:$0xff]
    %v95 = vld [vmem:[#allocation7 + $0x198] sm:$0xff]
    %v96 = vld [vmem:[#allocation7 + $0x1a0] sm:$0xff]
    %v97 = vld [vmem:[#allocation7 + $0x1a8] sm:$0xff]
    %v98 = vld [vmem:[#allocation7 + $0x1b0] sm:$0xff]
    %v99 = vld [vmem:[#allocation7 + $0x1b8] sm:$0xff]
    %v100 = vld [vmem:[#allocation7 + $0x1c0] sm:$0xff]
    %v101 = vld [vmem:[#allocation7 + $0x1c8] sm:$0xff]
    %v102 = vld [vmem:[#allocation7 + $0x1d0] sm:$0xff]
    %v103 = vld [vmem:[#allocation7 + $0x1d8] sm:$0xff]
    %v104 = vld [vmem:[#allocation7 + $0x1e0] sm:$0xff]
    %v105 = vld [vmem:[#allocation7 + $0x1e8] sm:$0xff]
    %v106 = vld [vmem:[#allocation7 + $0x1f0] sm:$0xff]
    %v107 = vld [vmem:[#allocation7 + $0x1f8] sm:$0xff]
    %v108 = vld [vmem:[#allocation7 + $0x200] sm:$0xff]
    %v109 = vld [vmem:[#allocation7 + $0x208] sm:$0xff]
    %v110 = vld [vmem:[#allocation7 + $0x210] sm:$0xff]
    %v111 = vld [vmem:[#allocation7 + $0x218] sm:$0xff]
    %v112 = vld [vmem:[#allocation7 + $0x220] sm:$0xff]
    %v113 = vld [vmem:[#allocation7 + $0x228] sm:$0xff]
    %v114 = vld [vmem:[#allocation7 + $0x230] sm:$0xff]
    %v115 = vld [vmem:[#allocation7 + $0x238] sm:$0xff]
    %v116 = vld [vmem:[#allocation7 + $0x240] sm:$0xff]
    %v117 = vld [vmem:[#allocation7 + $0x248] sm:$0xff]
    %v118 = vld [vmem:[#allocation7 + $0x250] sm:$0xff]
    %v119 = vld [vmem:[#allocation7 + $0x258] sm:$0xff]
    %v120 = vld [vmem:[#allocation7 + $0x260] sm:$0xff]
    %v121 = vld [vmem:[#allocation7 + $0x268] sm:$0xff]
    %v122 = vld [vmem:[#allocation7 + $0x270] sm:$0xff]
    %v123 = vld [vmem:[#allocation7 + $0x278] sm:$0xff]
    %v124 = vld [vmem:[#allocation7 + $0x280] sm:$0xff]
    %v125 = vld [vmem:[#allocation7 + $0x288] sm:$0xff]
    %v126 = vld [vmem:[#allocation7 + $0x290] sm:$0xff]
    %v127 = vld [vmem:[#allocation7 + $0x298] sm:$0xff]
    %v128 = vld [vmem:[#allocation7 + $0x2a0] sm:$0xff]
    %v129 = vld [vmem:[#allocation7 + $0x2a8] sm:$0xff]
    %v130 = vld [vmem:[#allocation7 + $0x2b0] sm:$0xff]
    %v131 = vld [vmem:[#allocation7 + $0x2b8] sm:$0xff]
    %v132 = vld [vmem:[#allocation7 + $0x2c0] sm:$0xff]
    %v133 = vld [vmem:[#allocation7 + $0x2c8] sm:$0xff]
    %v134 = vld [vmem:[#allocation7 + $0x2d0] sm:$0xff]
    %v135 = vld [vmem:[#allocation7 + $0x2d8] sm:$0xff]
    %v136 = vld [vmem:[#allocation7 + $0x2e0] sm:$0xff]
    %v137 = vld [vmem:[#allocation7 + $0x2e8] sm:$0xff]
    %v138 = vld [vmem:[#allocation7 + $0x2f0] sm:$0xff]
    %v139 = vld [vmem:[#allocation7 + $0x2f8] sm:$0xff]
    %v140 = vld [vmem:[#allocation7 + $0x300] sm:$0xff]
    %v141 = vld [vmem:[#allocation7 + $0x308] sm:$0xff]
    %v142 = vld [vmem:[#allocation7 + $0x310] sm:$0xff]
    %v143 = vld [vmem:[#allocation7 + $0x318] sm:$0xff]
    %v144 = vld [vmem:[#allocation7 + $0x320] sm:$0xff]
    %v145 = vld [vmem:[#allocation7 + $0x328] sm:$0xff]
    %v146 = vld [vmem:[#allocation7 + $0x330] sm:$0xff]
    %v147 = vld [vmem:[#allocation7 + $0x338] sm:$0xff]
    %v148 = vld [vmem:[#allocation7 + $0x340] sm:$0xff]
    %v149 = vld [vmem:[#allocation7 + $0x348] sm:$0xff]
    %v150 = vld [vmem:[#allocation7 + $0x350] sm:$0xff]
    %v151 = vld [vmem:[#allocation7 + $0x358] sm:$0xff]
    %v152 = vld [vmem:[#allocation7 + $0x360] sm:$0xff]
    %v153 = vld [vmem:[#allocation7 + $0x368] sm:$0xff]
    %v154 = vld [vmem:[#allocation7 + $0x370] sm:$0xff]
    %v155 = vld [vmem:[#allocation7 + $0x378] sm:$0xff]
    %v156 = vld [vmem:[#allocation7 + $0x380] sm:$0xff]
    %v157 = vld [vmem:[#allocation7 + $0x388] sm:$0xff]
    %v158 = vld [vmem:[#allocation7 + $0x390] sm:$0xff]
    %v159 = vld [vmem:[#allocation7 + $0x398] sm:$0xff]
    %v160 = vld [vmem:[#allocation7 + $0x3a0] sm:$0xff]
    %v161 = vld [vmem:[#allocation7 + $0x3a8] sm:$0xff]
    %v162 = vld [vmem:[#allocation7 + $0x3b0] sm:$0xff]
    %v163 = vld [vmem:[#allocation7 + $0x3b8] sm:$0xff]
    %v164 = vld [vmem:[#allocation7 + $0x3c0] sm:$0xff]
    %v165 = vld [vmem:[#allocation7 + $0x3c8] sm:$0xff]
    %v166 = vld [vmem:[#allocation7 + $0x3d0] sm:$0xff]
    %v167 = vld [vmem:[#allocation7 + $0x3d8] sm:$0xff]
    %v168 = vld [vmem:[#allocation7 + $0x3e0] sm:$0xff]
    %v169 = vld [vmem:[#allocation7 + $0x3e8] sm:$0xff]
    %v170 = vld [vmem:[#allocation7 + $0x3f0] sm:$0xff]
    %v171 = vld [vmem:[#allocation7 + $0x3f8] sm:$0xff]
    %v172 = vld [vmem:[#allocation7 + $0x400] ss:$0 sm:$0xff]
    %s173 = scalar_lea.vmem [#allocation7], 1040
    %v174 = vld [vmem:[%s173] ss:$8 sm:$0x3]
    %s175 = scalar_lea.vmem [#allocation7], 1056
    %v176 = vld [vmem:[%s175] ss:$8 sm:$0x3]
    %v177 = vld [vmem:[#allocation7 + $0x430] ss:$0 sm:$0xff]
    %v178 = vld [vmem:[#allocation7 + $0x440] ss:$0 sm:$0xff]
    %v179 = vld [vmem:[#allocation5] sm:$0xff]
    %v180 = vld [vmem:[#allocation5 + $0x8] sm:$0xf]
    %vm181 = vcmask 97280
    %v183 = vsel %vm181, %v179, 0
    %v186 = vsel %vm181, %v180, 0
    %vm188 = vcmask 1043456
    %v190 = vsel %vm188, %v57, 0
    %192 = vmatprep.subr.mxu0 0.0
    %193 = vmatpush1.msra.mxu0 0.0
    %194 = vmatprep.subr.mxu0 0.0
    %195 = vmatpush1.msra.mxu0 0.0
    %196 = vmatprep.subr.mxu0 0.0
    %197 = vmatpush1.msra.mxu0 0.0
    %198 = vmatprep.subr.mxu0 0.0
    %199 = vmatpush1.msra.mxu0 0.0
    %200 = vmatprep.subr.mxu0 0.0
    %201 = vmatpush1.msra.mxu0 0.0
    %202 = vmatprep.subr.mxu0 0.0
    %203 = vmatpush1.msra.mxu0 0.0
    %204 = vmatprep.subr.mxu0 0.0
    %205 = vmatpush1.msra.mxu0 0.0
    %206 = vmatprep.subr.mxu0 0.0
    %207 = vmatpush1.msra.mxu0 0.0
    %208 = vmatprep.subr.mxu0 0.0
    %209 = vmatpush1.msra.mxu0 0.0
    %210 = vmatprep.subr.mxu0 0.0
    %211 = vmatpush1.msra.mxu0 0.0
    %212 = vmatprep.subr.mxu0 0.0
    %213 = vmatpush1.msra.mxu0 0.0
    %214 = vmatprep.subr.mxu0 0.0
    %215 = vmatpush1.msra.mxu0 0.0
    %216 = vmatprep.subr.mxu0 0.0
    %217 = vmatpush1.msra.mxu0 0.0
    %218 = vmatprep.subr.mxu0 0.0
    %219 = vmatpush1.msra.mxu0 0.0
    %220 = vmatprep.subr.mxu0 0.0
    %221 = vmatpush1.msra.mxu0 %v190
    %222 = vmatprep.subr.mxu0 0.0
    %223 = vmatpush1.msra.mxu0 %v56
    %224 = vmatprep.subr.mxu0 0.0
    %225 = vmatpush2.msra.mxu0 0.0
    %226 = vmatprep.subr.mxu0 0.0
    %227 = vmatpush2.msra.mxu0 0.0
    %228 = vmatprep.subr.mxu0 0.0
    %229 = vmatpush2.msra.mxu0 0.0
    %230 = vmatprep.subr.mxu0 0.0
    %231 = vmatpush2.msra.mxu0 0.0
    %232 = vmatprep.subr.mxu0 0.0
    %233 = vmatpush2.msra.mxu0 0.0
    %234 = vmatprep.subr.mxu0 0.0
    %235 = vmatpush2.msra.mxu0 0.0
    %236 = vmatprep.subr.mxu0 0.0
    %237 = vmatpush2.msra.mxu0 0.0
    %238 = vmatprep.subr.mxu0 0.0
    %239 = vmatpush2.msra.mxu0 0.0
    %240 = vmatprep.subr.mxu0 0.0
    %241 = vmatpush2.msra.mxu0 0.0
    %242 = vmatprep.subr.mxu0 0.0
    %243 = vmatpush2.msra.mxu0 0.0
    %244 = vmatprep.subr.mxu0 0.0
    %245 = vmatpush2.msra.mxu0 0.0
    %246 = vmatprep.subr.mxu0 0.0
    %247 = vmatpush2.msra.mxu0 0.0
    %248 = vmatprep.subr.mxu0 0.0
    %249 = vmatpush2.msra.mxu0 0.0
    %250 = vmatprep.subr.mxu0 0.0
    %251 = vmatpush2.msra.mxu0 0.0
    %252 = vmatprep.subr.mxu0 0.0
    %253 = vmatpush2.msra.mxu0 0.0
    %254 = vmatprep.subr.mxu0 0.0
    %255 = vmatpush2.msra.mxu0 0.0
    %256 = vmatprep.mubr.f32.mxu0 0.0
    %257 = vmatmul.mubr.f32.gmra.mxu0 %v183
    %v258 = vpop.f32.mrf.mxu0
    %v259 = vadd.f32 0.0, %v258
    %v260 = vpop.f32.mrf.mxu0
    %261 = vmatprep.mubr.f32.mxu0 0.0
    %262 = vmatmul.mubr.f32.gmra.mxu0 %v186
    %v263 = vpop.f32.mrf.mxu0
    %v264 = vadd.f32 0.0, %v263
    %v265 = vpop.f32.mrf.mxu0
    %266 = vdwg.mxu0
    %267 = vmatprep.subr.mxu0 0.0
    %268 = vmatpush1.msra.mxu0 %v75
    %269 = vmatprep.subr.mxu0 0.0
    %270 = vmatpush1.msra.mxu0 %v74
    %271 = vmatprep.subr.mxu0 0.0
    %272 = vmatpush1.msra.mxu0 %v73
    %273 = vmatprep.subr.mxu0 0.0
    %274 = vmatpush1.msra.mxu0 %v72
    %275 = vmatprep.subr.mxu0 0.0
    %276 = vmatpush1.msra.mxu0 %v71
    %277 = vmatprep.subr.mxu0 0.0
    %278 = vmatpush1.msra.mxu0 %v70
    %279 = vmatprep.subr.mxu0 0.0
    %280 = vmatpush1.msra.mxu0 %v69
    %281 = vmatprep.subr.mxu0 0.0
    %282 = vmatpush1.msra.mxu0 %v68
    %283 = vmatprep.subr.mxu0 0.0
    %284 = vmatpush1.msra.mxu0 %v67
    %285 = vmatprep.subr.mxu0 0.0
    %286 = vmatpush1.msra.mxu0 %v66
    %287 = vmatprep.subr.mxu0 0.0
    %288 = vmatpush1.msra.mxu0 %v65
    %289 = vmatprep.subr.mxu0 0.0
    %290 = vmatpush1.msra.mxu0 %v64
    %291 = vmatprep.subr.mxu0 0.0
    %292 = vmatpush1.msra.mxu0 %v63
    %293 = vmatprep.subr.mxu0 0.0
    %294 = vmatpush1.msra.mxu0 %v62
    %295 = vmatprep.subr.mxu0 0.0
    %296 = vmatpush1.msra.mxu0 %v61
    %297 = vmatprep.subr.mxu0 0.0
    %298 = vmatpush1.msra.mxu0 %v60
    %299 = vmatprep.subr.mxu0 0.0
    %300 = vmatpush2.msra.mxu0 0.0
    %301 = vmatprep.subr.mxu0 0.0
    %302 = vmatpush2.msra.mxu0 0.0
    %303 = vmatprep.subr.mxu0 0.0
    %304 = vmatpush2.msra.mxu0 0.0
    %305 = vmatprep.subr.mxu0 0.0
    %306 = vmatpush2.msra.mxu0 0.0
    %307 = vmatprep.subr.mxu0 0.0
    %308 = vmatpush2.msra.mxu0 0.0
    %309 = vmatprep.subr.mxu0 0.0
    %310 = vmatpush2.msra.mxu0 0.0
    %311 = vmatprep.subr.mxu0 0.0
    %312 = vmatpush2.msra.mxu0 0.0
    %313 = vmatprep.subr.mxu0 0.0
    %314 = vmatpush2.msra.mxu0 0.0
    %315 = vmatprep.subr.mxu0 0.0
    %316 = vmatpush2.msra.mxu0 0.0
    %317 = vmatprep.subr.mxu0 0.0
    %318 = vmatpush2.msra.mxu0 0.0
    %319 = vmatprep.subr.mxu0 0.0
    %320 = vmatpush2.msra.mxu0 0.0
    %321 = vmatprep.subr.mxu0 0.0
    %322 = vmatpush2.msra.mxu0 0.0
    %323 = vmatprep.subr.mxu0 0.0
    %324 = vmatpush2.msra.mxu0 0.0
    %325 = vmatprep.subr.mxu0 0.0
    %326 = vmatpush2.msra.mxu0 0.0
    %327 = vmatprep.subr.mxu0 0.0
    %328 = vmatpush2.msra.mxu0 0.0
    %329 = vmatprep.subr.mxu0 0.0
    %330 = vmatpush2.msra.mxu0 0.0
    %331 = vmatprep.mubr.f32.mxu0 0.0
    %332 = vmatmul.mubr.f32.gmra.mxu0 %v259
    %v333 = vpop.f32.mrf.mxu0
    %v334 = vadd.f32 %v172, %v333
    %v335 = vpop.f32.mrf.mxu0
    %336 = vmatprep.mubr.f32.mxu0 0.0
    %337 = vmatmul.mubr.f32.gmra.mxu0 %v264
    %v338 = vpop.f32.mrf.mxu0
    %v339 = vadd.f32 %v172, %v338
    %v340 = vpop.f32.mrf.mxu0
    %341 = vdwg.mxu0
    %v342 = vmax.f32 %v334, 0.0
    %v343 = vmax.f32 %v339, 0.0
    %v344 = vadd.f32 %v342, %v56
    %v345 = vadd.f32 %v343, %v57
    %v346 = vmul.f32 %v344, %v58
    %v347 = vmul.f32 %v345, %v59
    %v349 = vlaneseq
    %v350 = vshrl.u32 %v349, 7
    %v351 = vsub.s32 0, %v350
    %v352 = vrot.slane %v174, %v351
    %v353 = vlaneseq
    %v354 = vshrl.u32 %v353, 7
    %v355 = vsub.s32 1, %v354
    %v356 = vrot.slane %v174, %v355
    %359 = vmatprep.subr.mxu0 %v107
    %360 = vmatpush1.msra.mxu0 %v106
    %361 = vmatprep.subr.mxu0 %v105
    %362 = vmatpush1.msra.mxu0 %v104
    %363 = vmatprep.subr.mxu0 %v103
    %364 = vmatpush1.msra.mxu0 %v102
    %365 = vmatprep.subr.mxu0 %v101
    %366 = vmatpush1.msra.mxu0 %v100
    %367 = vmatprep.subr.mxu0 %v99
    %368 = vmatpush1.msra.mxu0 %v98
    %369 = vmatprep.subr.mxu0 %v97
    %370 = vmatpush1.msra.mxu0 %v96
    %371 = vmatprep.subr.mxu0 %v95
    %372 = vmatpush1.msra.mxu0 %v94
    %373 = vmatprep.subr.mxu0 %v93
    %374 = vmatpush1.msra.mxu0 %v92
    %375 = vmatprep.subr.mxu0 %v91
    %376 = vmatpush1.msra.mxu0 %v90
    %377 = vmatprep.subr.mxu0 %v89
    %378 = vmatpush1.msra.mxu0 %v88
    %379 = vmatprep.subr.mxu0 %v87
    %380 = vmatpush1.msra.mxu0 %v86
    %381 = vmatprep.subr.mxu0 %v85
    %382 = vmatpush1.msra.mxu0 %v84
    %383 = vmatprep.subr.mxu0 %v83
    %384 = vmatpush1.msra.mxu0 %v82
    %385 = vmatprep.subr.mxu0 %v81
    %386 = vmatpush1.msra.mxu0 %v80
    %387 = vmatprep.subr.mxu0 %v79
    %388 = vmatpush1.msra.mxu0 %v78
    %389 = vmatprep.subr.mxu0 %v77
    %390 = vmatpush1.msra.mxu0 %v76
    %391 = vmatprep.subr.mxu0 0.0
    %392 = vmatpush2.msra.mxu0 0.0
    %393 = vmatprep.subr.mxu0 0.0
    %394 = vmatpush2.msra.mxu0 0.0
    %395 = vmatprep.subr.mxu0 0.0
    %396 = vmatpush2.msra.mxu0 0.0
    %397 = vmatprep.subr.mxu0 0.0
    %398 = vmatpush2.msra.mxu0 0.0
    %399 = vmatprep.subr.mxu0 0.0
    %400 = vmatpush2.msra.mxu0 0.0
    %401 = vmatprep.subr.mxu0 0.0
    %402 = vmatpush2.msra.mxu0 0.0
    %403 = vmatprep.subr.mxu0 0.0
    %404 = vmatpush2.msra.mxu0 0.0
    %405 = vmatprep.subr.mxu0 0.0
    %406 = vmatpush2.msra.mxu0 0.0
    %407 = vmatprep.subr.mxu0 0.0
    %408 = vmatpush2.msra.mxu0 0.0
    %409 = vmatprep.subr.mxu0 0.0
    %410 = vmatpush2.msra.mxu0 0.0
    %411 = vmatprep.subr.mxu0 0.0
    %412 = vmatpush2.msra.mxu0 0.0
    %413 = vmatprep.subr.mxu0 0.0
    %414 = vmatpush2.msra.mxu0 0.0
    %415 = vmatprep.subr.mxu0 0.0
    %416 = vmatpush2.msra.mxu0 0.0
    %417 = vmatprep.subr.mxu0 0.0
    %418 = vmatpush2.msra.mxu0 0.0
    %419 = vmatprep.subr.mxu0 0.0
    %420 = vmatpush2.msra.mxu0 0.0
    %421 = vmatprep.subr.mxu0 0.0
    %422 = vmatpush2.msra.mxu0 0.0
    %423 = vmatprep.mubr.f32.mxu0 0.0
    %424 = vmatmul.mubr.f32.gmra.mxu0 %v346
    %v425 = vpop.f32.mrf.mxu0
    %v426 = vadd.f32 %v352, %v425
    %v427 = vpop.f32.mrf.mxu0
    %v428 = vadd.f32 %v356, %v427
    %429 = vmatprep.mubr.f32.mxu0 0.0
    %430 = vmatmul.mubr.f32.gmra.mxu0 %v347
    %v431 = vpop.f32.mrf.mxu0
    %v432 = vadd.f32 %v352, %v431
    %v433 = vpop.f32.mrf.mxu0
    %v434 = vadd.f32 %v356, %v433
    %435 = vdwg.mxu0
    %v436 = vmax.f32 %v426, 0.0
    %v437 = vmax.f32 %v428, 0.0
    %v438 = vmax.f32 %v432, 0.0
    %v439 = vmax.f32 %v434, 0.0
    %v441 = vlaneseq
    %v442 = vshrl.u32 %v441, 7
    %v443 = vsub.s32 0, %v442
    %v444 = vrot.slane %v176, %v443
    %v445 = vlaneseq
    %v446 = vshrl.u32 %v445, 7
    %v447 = vsub.s32 1, %v446
    %v448 = vrot.slane %v176, %v447
    %451 = vmatprep.subr.mxu0 %v139
    %452 = vmatpush1.msra.mxu0 %v138
    %453 = vmatprep.subr.mxu0 %v137
    %454 = vmatpush1.msra.mxu0 %v136
    %455 = vmatprep.subr.mxu0 %v135
    %456 = vmatpush1.msra.mxu0 %v134
    %457 = vmatprep.subr.mxu0 %v133
    %458 = vmatpush1.msra.mxu0 %v132
    %459 = vmatprep.subr.mxu0 %v131
    %460 = vmatpush1.msra.mxu0 %v130
    %461 = vmatprep.subr.mxu0 %v129
    %462 = vmatpush1.msra.mxu0 %v128
    %463 = vmatprep.subr.mxu0 %v127
    %464 = vmatpush1.msra.mxu0 %v126
    %465 = vmatprep.subr.mxu0 %v125
    %466 = vmatpush1.msra.mxu0 %v124
    %467 = vmatprep.subr.mxu0 %v123
    %468 = vmatpush1.msra.mxu0 %v122
    %469 = vmatprep.subr.mxu0 %v121
    %470 = vmatpush1.msra.mxu0 %v120
    %471 = vmatprep.subr.mxu0 %v119
    %472 = vmatpush1.msra.mxu0 %v118
    %473 = vmatprep.subr.mxu0 %v117
    %474 = vmatpush1.msra.mxu0 %v116
    %475 = vmatprep.subr.mxu0 %v115
    %476 = vmatpush1.msra.mxu0 %v114
    %477 = vmatprep.subr.mxu0 %v113
    %478 = vmatpush1.msra.mxu0 %v112
    %479 = vmatprep.subr.mxu0 %v111
    %480 = vmatpush1.msra.mxu0 %v110
    %481 = vmatprep.subr.mxu0 %v109
    %482 = vmatpush1.msra.mxu0 %v108
    %483 = vmatprep.subr.mxu0 %v171
    %484 = vmatpush2.msra.mxu0 %v170
    %485 = vmatprep.subr.mxu0 %v169
    %486 = vmatpush2.msra.mxu0 %v168
    %487 = vmatprep.subr.mxu0 %v167
    %488 = vmatpush2.msra.mxu0 %v166
    %489 = vmatprep.subr.mxu0 %v165
    %490 = vmatpush2.msra.mxu0 %v164
    %491 = vmatprep.subr.mxu0 %v163
    %492 = vmatpush2.msra.mxu0 %v162
    %493 = vmatprep.subr.mxu0 %v161
    %494 = vmatpush2.msra.mxu0 %v160
    %495 = vmatprep.subr.mxu0 %v159
    %496 = vmatpush2.msra.mxu0 %v158
    %497 = vmatprep.subr.mxu0 %v157
    %498 = vmatpush2.msra.mxu0 %v156
    %499 = vmatprep.subr.mxu0 %v155
    %500 = vmatpush2.msra.mxu0 %v154
    %501 = vmatprep.subr.mxu0 %v153
    %502 = vmatpush2.msra.mxu0 %v152
    %503 = vmatprep.subr.mxu0 %v151
    %504 = vmatpush2.msra.mxu0 %v150
    %505 = vmatprep.subr.mxu0 %v149
    %506 = vmatpush2.msra.mxu0 %v148
    %507 = vmatprep.subr.mxu0 %v147
    %508 = vmatpush2.msra.mxu0 %v146
    %509 = vmatprep.subr.mxu0 %v145
    %510 = vmatpush2.msra.mxu0 %v144
    %511 = vmatprep.subr.mxu0 %v143
    %512 = vmatpush2.msra.mxu0 %v142
    %513 = vmatprep.subr.mxu0 %v141
    %514 = vmatpush2.msra.mxu0 %v140
    %515 = vmatprep.mubr.f32.mxu0 %v437
    %516 = vmatmul.mubr.f32.gmra.mxu0 %v436
    %v517 = vpop.f32.mrf.mxu0
    %v518 = vadd.f32 %v444, %v517
    %v519 = vpop.f32.mrf.mxu0
    %v520 = vadd.f32 %v448, %v519
    %521 = vmatprep.mubr.f32.mxu0 %v439
    %522 = vmatmul.mubr.f32.gmra.mxu0 %v438
    %v523 = vpop.f32.mrf.mxu0
    %v524 = vadd.f32 %v444, %v523
    %v525 = vpop.f32.mrf.mxu0
    %v526 = vadd.f32 %v448, %v525
    %527 = vdwg.mxu0
    %v528 = vmax.f32 %v518, 0.0
    %v529 = vmax.f32 %v520, 0.0
    %v530 = vmax.f32 %v524, 0.0
    %v531 = vmax.f32 %v526, 0.0
    %v534 = vrot.slane %v528, 2
    %v535 = vrot.slane %v529, 2
    %v538 = vadd.f32 %v528, %v534
    %v539 = vadd.f32 %v529, %v535
    %v540 = vrot.slane %v528, 4
    %v541 = vrot.slane %v529, 4
    %v544 = vadd.f32 %v538, %v540
    %v545 = vadd.f32 %v539, %v541
    %v546 = vrot.slane %v528, 6
    %v547 = vrot.slane %v529, 6
    %v550 = vadd.f32 %v544, %v546
    %v551 = vadd.f32 %v545, %v547
    %v552 = vadd.f32 %v550, %v530
    %v553 = vadd.f32 %v551, %v531
    %v556 = vrot.slane %v530, 2
    %v557 = vrot.slane %v531, 2
    %v560 = vadd.f32 %v552, %v556
    %v561 = vadd.f32 %v553, %v557
    %v562 = vlaneseq
    %v563 = vand.u32 %v562, 127
    %v564 = vmul.f32 %v560, %v177
    %vm565 = vcmask 254976
    %v566 = vsel %vm565, %v564, 0.0
    %567 = vadd.xlane.f32.xlu0 %v566
    %v568 = vpop.xlane.xlu0 %567
    %vm569 = vcmp.eq.s32.totalorder %v563, 0
    %v570 = vsel %vm569, %v568, 0.0
    %572 = vrot.lane.b32.xlu0 %v177, 32
    %v573 = vpop.permute.xlu0 %572
    %v575 = vmul.f32 %v560, %v573
    %577 = vrot.lane.b32.xlu0 %v575, 96
    %v578 = vpop.permute.xlu0 %577
    %v580 = vsel %vm565, %v578, 0.0
    %581 = vadd.xlane.f32.xlu0 %v580
    %v582 = vpop.xlane.xlu0 %581
    %vm583 = vcmp.eq.s32.totalorder %v563, 1
    %v584 = vsel %vm583, %v582, %v570
    %585 = vrot.lane.b32.xlu0 %v177, 64
    %v586 = vpop.permute.xlu0 %585
    %v588 = vmul.f32 %v560, %v586
    %590 = vrot.lane.b32.xlu0 %v588, 64
    %v591 = vpop.permute.xlu0 %590
    %v593 = vsel %vm565, %v591, 0.0
    %594 = vadd.xlane.f32.xlu0 %v593
    %v595 = vpop.xlane.xlu0 %594
    %vm596 = vcmp.eq.s32.totalorder %v563, 2
    %v597 = vsel %vm596, %v595, %v584
    %598 = vrot.lane.b32.xlu0 %v177, 96
    %v599 = vpop.permute.xlu0 %598
    %v601 = vmul.f32 %v560, %v599
    %603 = vrot.lane.b32.xlu0 %v601, 32
    %v604 = vpop.permute.xlu0 %603
    %v606 = vsel %vm565, %v604, 0.0
    %607 = vadd.xlane.f32.xlu0 %v606
    %v608 = vpop.xlane.xlu0 %607
    %vm609 = vcmp.eq.s32.totalorder %v563, 3
    %v610 = vsel %vm609, %v608, %v597
    %v611 = vmul.f32 %v561, %v177
    %v612 = vsel %vm565, %v611, 0.0
    %613 = vadd.xlane.f32.xlu0 %v612
    %v614 = vpop.xlane.xlu0 %613
    %vm615 = vcmp.eq.s32.totalorder %v563, 4
    %v616 = vsel %vm615, %v614, %v610
    %v617 = vmul.f32 %v561, %v573
    %619 = vrot.lane.b32.xlu0 %v617, 96
    %v620 = vpop.permute.xlu0 %619
    %v622 = vsel %vm565, %v620, 0.0
    %623 = vadd.xlane.f32.xlu0 %v622
    %v624 = vpop.xlane.xlu0 %623
    %vm625 = vcmp.eq.s32.totalorder %v563, 5
    %v626 = vsel %vm625, %v624, %v616
    %v627 = vmul.f32 %v561, %v586
    %629 = vrot.lane.b32.xlu0 %v627, 64
    %v630 = vpop.permute.xlu0 %629
    %v632 = vsel %vm565, %v630, 0.0
    %633 = vadd.xlane.f32.xlu0 %v632
    %v634 = vpop.xlane.xlu0 %633
    %vm635 = vcmp.eq.s32.totalorder %v563, 6
    %v636 = vsel %vm635, %v634, %v626
    %v637 = vmul.f32 %v561, %v599
    %639 = vrot.lane.b32.xlu0 %v637, 32
    %v640 = vpop.permute.xlu0 %639
    %v642 = vsel %vm565, %v640, 0.0
    %643 = vadd.xlane.f32.xlu0 %v642
    %v644 = vpop.xlane.xlu0 %643
    %vm645 = vcmp.eq.s32.totalorder %v563, 7
    %v646 = vsel %vm645, %v644, %v636
    %648 = vset.pattern.permute.xlu0 0
    %649 = vperm.xlu0 %648, %v178
    %v650 = vpop.permute.xlu0 %649
    %v652 = vadd.f32 %v646, %v650
    %vm653 = vcmask 58368
    %654 = vst.msk [vmem:[#allocation8] sm:$0x3] %vm653, %v652
    // Predicated region
    $region26: #{tpu_custom_call.1} parent=1 // pred_check
      _
    $region27: #{tpu_custom_call.1} parent=1 // pred_check_branch
      %656 = sbr.rel (0) target = $region29
    $region28: #{tpu_custom_call.1} parent=1 // pred_region
      %s658 = ssub.s32 32, 32
      %659 = vsyncadd [#allocation4], %s658
      %s661 = sshll.u32 [#allocation8], 4
      %s662 = int_to_ptr.vmem [resolvable:$true] %s661
      %664 = dma.vmem_to_hbm [thread:$0]  %s662, 32, %s3, [#allocation4]
    $region29: #{tpu_custom_call.1} parent=1 // pred_fallthru
      _
    // Predicated region
    $region30: #{tpu_custom_call.1} parent=1 // pred_check
      _
    $region31: #{tpu_custom_call.1} parent=1 // pred_check_branch
      %666 = sbr.rel (0) target = $region33
    $region32: #{tpu_custom_call.1} parent=1 // pred_region
      %667 = dma.done [#allocation4], 32
    $region33: #{tpu_custom_call.1} parent=1 // pred_fallthru
      _
    %668 = vsyncpa [#allocation3], 1
    %669 = vsyncpa [#allocation6], 1
    %670 = vsyncpa [#allocation4], 1

</llo_original>
